<compile_context>
chip_gen: v5e
topology: v5e:2x2
jax: 0.10.0
libtpu: 0.0.40
codegen_flags: <defaults>
</compile_context>

<pallas_src>
import jax
import jax.numpy as jnp
from jax import lax
from jax.experimental import pallas as pl
from jax.experimental.pallas import tpu as pltpu

_SUBLANE = 8


def _devdan_kernel(x_ref, w_ref, b_ref, bd_ref, h_ref, r_ref, r2_ref, stk_ref):
    x = x_ref[...]      # (B, NI)
    w = w_ref[...]      # (NH, NI)
    b = b_ref[...]      # (1, NH)
    bd = bd_ref[...]    # (1, NI)

    # Encoder: h = relu(x @ W.T + b); contraction expressed directly (no W.T value).
    h = lax.dot_general(
        x, w,
        dimension_numbers=(((1,), (1,)), ((), ())),
        preferred_element_type=jnp.float32,
    ) + b
    h = jnp.maximum(h, 0.0)
    h_ref[...] = h.astype(h_ref.dtype)

    # Fused decoder: one MXU pass over rows [h ; h*h] with W held stationary.
    # Rows are staged in VMEM scratch at static, sublane-aligned offsets
    # instead of a materialised jnp.concatenate along the sublane axis.
    b_rows = h_ref.shape[0]            # logical batch
    half = stk_ref.shape[0] // 2       # sublane-aligned offset for the h^2 half
    stk_ref[...] = jnp.zeros_like(stk_ref)        # keep alignment rows defined (cheap)
    stk_ref[0:b_rows, :] = h
    stk_ref[half:half + b_rows, :] = h * h

    lin = jnp.dot(stk_ref[...], w, preferred_element_type=jnp.float32) + bd
    lin = jax.nn.sigmoid(lin)                      # EUP transcendental
    r_ref[...] = lin[0:b_rows].astype(r_ref.dtype)
    r2_ref[...] = lin[half:half + b_rows].astype(r2_ref.dtype)


def _round_up(n, m):
    return ((n + m - 1) // m) * m


def devdan_forward(x, weight, bias, bias_decoder):
    """x: (B, no_input); weight: (no_hidden, no_input); bias: (no_hidden,);
    bias_decoder: (no_input,). Returns (h, r, r2) at logical shapes."""
    B, no_input = x.shape
    no_hidden = weight.shape[0]
    bp = _round_up(B, _SUBLANE)   # sublane-aligned stacking offset inside the kernel

    x = x.astype(jnp.float32)
    w = weight.astype(jnp.float32)
    b2 = bias.reshape(1, no_hidden).astype(jnp.float32)
    bd2 = bias_decoder.reshape(1, no_input).astype(jnp.float32)

    vmem = pl.BlockSpec(memory_space=pltpu.MemorySpace.VMEM)
    out_shapes = (
        jax.ShapeDtypeStruct((B, no_hidden), jnp.float32),   # h
        jax.ShapeDtypeStruct((B, no_input), jnp.float32),    # r
        jax.ShapeDtypeStruct((B, no_input), jnp.float32),    # r2
    )
    return pl.pallas_call(
        _devdan_kernel,
        out_shape=out_shapes,
        in_specs=[vmem, vmem, vmem, vmem],
        out_specs=(vmem, vmem, vmem),
        scratch_shapes=[pltpu.VMEM((2 * bp, no_hidden), jnp.float32)],
    )(x, w, b2, bd2)


def _reference(x, weight, bias, bias_decoder):
    h = jnp.maximum(x @ weight.T + bias, 0.0)
    r = jax.nn.sigmoid(h @ weight + bias_decoder)
    r2 = jax.nn.sigmoid((h * h) @ weight + bias_decoder)
    return h, r, r2


if __name__ == "__main__":
    no_input, no_hidden, batch = 32, 16, 8
    key = jax.random.PRNGKey(0)
    kx, kw = jax.random.split(key)

    # Deterministic parameter init mirroring the module's __init__:
    #   xavier_uniform_ on linear.weight, zeros for linear.bias and biasDecoder.
    bound = (6.0 / (no_input + no_hidden)) ** 0.5
    weight = jax.random.uniform(
        kw, (no_hidden, no_input), minval=-bound, maxval=bound, dtype=jnp.float32
    )
    bias = jnp.zeros((no_hidden,), jnp.float32)
    bias_decoder = jnp.zeros((no_input,), jnp.float32)

    x = jax.random.normal(kx, (batch, no_input), dtype=jnp.float32)

    h, r, r2 = jax.jit(devdan_forward)(x, weight, bias, bias_decoder)
    jax.block_until_ready((h, r, r2))

    h_ref, r_ref, r2_ref = _reference(x, weight, bias, bias_decoder)
    assert h.shape == h_ref.shape and r.shape == r_ref.shape and r2.shape == r2_ref.shape
    assert jnp.allclose(h, h_ref, atol=1e-5)
    assert jnp.allclose(r, r_ref, atol=1e-5)
    assert jnp.allclose(r2, r2_ref, atol=1e-5)

    print("KERNEL_OK")
</pallas_src>

<mosaic_0001>
module attributes {stable_mosaic.version = 11 : i64} {
  func.func @_devdan_kernel(%arg0: memref<8x32xf32, #tpu.memory_space<vmem>>, %arg1: memref<16x32xf32, #tpu.memory_space<vmem>>, %arg2: memref<1x16xf32, #tpu.memory_space<vmem>>, %arg3: memref<1x32xf32, #tpu.memory_space<vmem>>, %arg4: memref<8x16xf32, #tpu.memory_space<vmem>>, %arg5: memref<8x32xf32, #tpu.memory_space<vmem>>, %arg6: memref<8x32xf32, #tpu.memory_space<vmem>>, %arg7: memref<16x16xf32, #tpu.memory_space<vmem>>) attributes {dimension_semantics = [], scalar_prefetch = 0 : i64, scratch_operands = 1 : i64, tpu.core_type = #tpu.core_type<tc>} {
    %c0 = arith.constant 0 : index
    %c0_0 = arith.constant 0 : index
    %0 = vector.load %arg0[%c0, %c0_0] : memref<8x32xf32, #tpu.memory_space<vmem>>, vector<8x32xf32>
    %c0_1 = arith.constant 0 : index
    %c0_2 = arith.constant 0 : index
    %1 = vector.load %arg1[%c0_1, %c0_2] : memref<16x32xf32, #tpu.memory_space<vmem>>, vector<16x32xf32>
    %c0_3 = arith.constant 0 : index
    %c0_4 = arith.constant 0 : index
    %2 = vector.load %arg2[%c0_3, %c0_4] : memref<1x16xf32, #tpu.memory_space<vmem>>, vector<1x16xf32>
    %c0_5 = arith.constant 0 : index
    %c0_6 = arith.constant 0 : index
    %3 = vector.load %arg3[%c0_5, %c0_6] : memref<1x32xf32, #tpu.memory_space<vmem>>, vector<1x32xf32>
    %cst = arith.constant dense<0.000000e+00> : vector<8x16xf32>
    %4 = tpu.matmul %0, %1, %cst {dimension_numbers = #tpu.dot_dimension_numbers<[1], [1], [0], [0], [0, 0, 1, 0], [], []>} : vector<8x32xf32>, vector<16x32xf32>, vector<8x16xf32> -> vector<8x16xf32>
    %5 = vector.broadcast %2 : vector<1x16xf32> to vector<8x16xf32>
    %6 = arith.addf %4, %5 : vector<8x16xf32>
    %cst_7 = arith.constant 0.000000e+00 : f32
    %7 = vector.broadcast %cst_7 : f32 to vector<8x16xf32>
    %8 = arith.maximumf %6, %7 : vector<8x16xf32>
    %c0_8 = arith.constant 0 : index
    %c0_9 = arith.constant 0 : index
    %9 = vector.load %arg4[%c0_8, %c0_9] : memref<8x16xf32, #tpu.memory_space<vmem>>, vector<8x16xf32>
    tpu.vector_store %arg4[%c0_8, %c0_9], %8 {strides = array<i32>} : memref<8x16xf32, #tpu.memory_space<vmem>>, vector<8x16xf32>,
    %cst_10 = arith.constant 0.000000e+00 : f32
    %10 = vector.broadcast %cst_10 : f32 to vector<16x16xf32>
    %c0_11 = arith.constant 0 : index
    %c0_12 = arith.constant 0 : index
    %11 = vector.load %arg7[%c0_11, %c0_12] : memref<16x16xf32, #tpu.memory_space<vmem>>, vector<16x16xf32>
    tpu.vector_store %arg7[%c0_11, %c0_12], %10 {strides = array<i32>} : memref<16x16xf32, #tpu.memory_space<vmem>>, vector<16x16xf32>,
    %c0_13 = arith.constant 0 : index
    %c0_14 = arith.constant 0 : index
    %12 = vector.load %arg7[%c0_13, %c0_14] : memref<16x16xf32, #tpu.memory_space<vmem>>, vector<8x16xf32>
    tpu.vector_store %arg7[%c0_13, %c0_14], %8 {strides = array<i32>} : memref<16x16xf32, #tpu.memory_space<vmem>>, vector<8x16xf32>,
    %13 = arith.mulf %8, %8 : vector<8x16xf32>
    %c8 = arith.constant 8 : index
    %c0_15 = arith.constant 0 : index
    %14 = vector.load %arg7[%c8, %c0_15] : memref<16x16xf32, #tpu.memory_space<vmem>>, vector<8x16xf32>
    tpu.vector_store %arg7[%c8, %c0_15], %13 {strides = array<i32>} : memref<16x16xf32, #tpu.memory_space<vmem>>, vector<8x16xf32>,
    %c0_16 = arith.constant 0 : index
    %c0_17 = arith.constant 0 : index
    %15 = vector.load %arg7[%c0_16, %c0_17] : memref<16x16xf32, #tpu.memory_space<vmem>>, vector<16x16xf32>
    %cst_18 = arith.constant dense<0.000000e+00> : vector<16x32xf32>
    %16 = tpu.matmul %15, %1, %cst_18 {dimension_numbers = #tpu.dot_dimension_numbers<[1], [0], [0], [1], [0, 0, 1, 1], [], []>} : vector<16x16xf32>, vector<16x32xf32>, vector<16x32xf32> -> vector<16x32xf32>
    %17 = vector.broadcast %3 : vector<1x32xf32> to vector<16x32xf32>
    %18 = arith.addf %16, %17 : vector<16x32xf32>
    %19 = arith.negf %18 : vector<16x32xf32>
    %20 = math.exp %19 : vector<16x32xf32>
    %cst_19 = arith.constant 1.000000e+00 : f32
    %21 = vector.broadcast %cst_19 : f32 to vector<16x32xf32>
    %22 = arith.addf %21, %20 : vector<16x32xf32>
    %23 = arith.divf %21, %22 : vector<16x32xf32>
    %24 = vector.extract_strided_slice %23 {offsets = [0, 0], sizes = [8, 32], strides = [1, 1]} : vector<16x32xf32> to vector<8x32xf32>
    %c0_20 = arith.constant 0 : index
    %c0_21 = arith.constant 0 : index
    %25 = vector.load %arg5[%c0_20, %c0_21] : memref<8x32xf32, #tpu.memory_space<vmem>>, vector<8x32xf32>
    tpu.vector_store %arg5[%c0_20, %c0_21], %24 {strides = array<i32>} : memref<8x32xf32, #tpu.memory_space<vmem>>, vector<8x32xf32>,
    %26 = vector.extract_strided_slice %23 {offsets = [8, 0], sizes = [8, 32], strides = [1, 1]} : vector<16x32xf32> to vector<8x32xf32>
    %c0_22 = arith.constant 0 : index
    %c0_23 = arith.constant 0 : index
    %27 = vector.load %arg6[%c0_22, %c0_23] : memref<8x32xf32, #tpu.memory_space<vmem>>, vector<8x32xf32>
    tpu.vector_store %arg6[%c0_22, %c0_23], %26 {strides = array<i32>} : memref<8x32xf32, #tpu.memory_space<vmem>>, vector<8x32xf32>,
    return
  }
}

</mosaic_0001>

<llo_original>
// kernel: devdan_forward.1
$region0: #{devdan_forward.1}
  #allocation0 [shape = 'u32[]', space=smem, size = 0x4, offset = 0x4, fixed_abs, tag = 'smem constant byte address 0x4 - core index']
  #allocation1 [shape = 'u32[72,128]{1,0:T(1,128)}', space=vmem, size = 0x9000, scoped, tag = 'internal scratch']
  #allocation2 [shape = 'f32[16,16]{1,0:T(8,128)}', space=vmem, size = 0x2000, scoped, tag = 'scratch operand']
  %s0 = inlined_call_operand.hbm [shape: f32[8,32], index: 0, kind: input, shape index: {}]
  %s1 = inlined_call_operand.hbm [shape: f32[16,32], index: 1, kind: input, shape index: {}]
  %s2 = inlined_call_operand.vmem [shape: f32[1,16], index: 2, kind: input, shape index: {}]
  %s3 = inlined_call_operand.vmem [shape: f32[1,32], index: 3, kind: input, shape index: {}]
  %s4 = inlined_call_operand.hbm [shape: f32[8,16], index: 4, kind: output, shape index: {0}]
  %s5 = inlined_call_operand.hbm [shape: f32[8,32], index: 5, kind: output, shape index: {1}]
  %s6 = inlined_call_operand.hbm [shape: f32[8,32], index: 6, kind: output, shape index: {2}]
  %7 = xla_tuple %s4, %s5, %s6
  %s8 = sld [smem:[#allocation0]]
  $region50: #{devdan_forward.1} parent=0
    _
  %s10 = ssub.s32 1, %s8
  %s11 = scalar_select 0, %s10, %s8
  $region1: #{devdan_forward.1} parent=0
    #allocation3 [shape = 'u8[4096]{0}', space=vmem, size = 0x1000, scoped, tag = 'input window, operand 0, single buffered']
    #allocation4 [shape = 's32[1]{0}', space=sflag, size = 0x4, scoped, tag = 'scoped memory for devdan_forward.1']
    #allocation5 [shape = 's32[1]{0}', space=sflag, size = 0x4, scoped, tag = 'scoped memory for devdan_forward.1']
    #allocation6 [shape = 'u8[8192]{0}', space=vmem, size = 0x2000, scoped, tag = 'input window, operand 1, single buffered']
    #allocation7 [shape = 's32[1]{0}', space=sflag, size = 0x4, scoped, tag = 'scoped memory for devdan_forward.1']
    #allocation8 [shape = 'u8[4096]{0}', space=vmem, size = 0x1000, scoped, tag = 'output window, operand 0, single buffered']
    #allocation9 [shape = 'u8[4096]{0}', space=vmem, size = 0x1000, scoped, tag = 'output window, operand 1, single buffered']
    #allocation10 [shape = 's32[1]{0}', space=sflag, size = 0x4, scoped, tag = 'scoped memory for devdan_forward.1']
    #allocation11 [shape = 'u8[4096]{0}', space=vmem, size = 0x1000, scoped, tag = 'output window, operand 2, single buffered']
    %12 = vsyncpa [#allocation4], 0
    %13 = vsyncpa [#allocation7], 0
    %14 = vsyncpa [#allocation5], 0
    %15 = vsyncpa [#allocation10], 0
    // Predicated region
    $region2: #{devdan_forward.1} parent=1 // pred_check
      _
    $region3: #{devdan_forward.1} parent=1 // pred_check_branch
      %17 = sbr.rel (0) target = $region5
    $region4: #{devdan_forward.1} parent=1 // pred_region
      %19 = vsyncadd [#allocation4], 0
      %s21 = sshll.u32 %s0, 4
      %s22 = int_to_ptr.hbm [resolvable:$true] %s21
      %s23 = sshll.u32 [#allocation3], 4
      %s24 = int_to_ptr.vmem [resolvable:$true] %s23
      %26 = dma.hbm_to_vmem [thread:$0]  %s22, 128, %s24, [#allocation4]
    $region5: #{devdan_forward.1} parent=1 // pred_fallthru
      _
    // Predicated region
    $region6: #{devdan_forward.1} parent=1 // pred_check
      _
    $region7: #{devdan_forward.1} parent=1 // pred_check_branch
      %28 = sbr.rel (0) target = $region9
    $region8: #{devdan_forward.1} parent=1 // pred_region
      %30 = vsyncadd [#allocation7], 0
      %s31 = sshll.u32 %s1, 4
      %s32 = int_to_ptr.hbm [resolvable:$true] %s31
      %s33 = sshll.u32 [#allocation6], 4
      %s34 = int_to_ptr.vmem [resolvable:$true] %s33
      %39 = dma.hbm_to_vmem [thread:$0]  %s32, 256, %s34, [#allocation7], 128, 128, 8
    $region9: #{devdan_forward.1} parent=1 // pred_fallthru
      _
    // Predicated region
    $region10: #{devdan_forward.1} parent=1 // pred_check
      _
    $region11: #{devdan_forward.1} parent=1 // pred_check_branch
      %41 = sbr.rel (0) target = $region13
    $region12: #{devdan_forward.1} parent=1 // pred_region
      _
    $region13: #{devdan_forward.1} parent=1 // pred_fallthru
      _
    // Predicated region
    $region14: #{devdan_forward.1} parent=1 // pred_check
      _
    $region15: #{devdan_forward.1} parent=1 // pred_check_branch
      %43 = sbr.rel (0) target = $region17
    $region16: #{devdan_forward.1} parent=1 // pred_region
      _
    $region17: #{devdan_forward.1} parent=1 // pred_fallthru
      _
    // Predicated region
    $region18: #{devdan_forward.1} parent=1 // pred_check
      _
    $region19: #{devdan_forward.1} parent=1 // pred_check_branch
      %45 = sbr.rel (0) target = $region21
    $region20: #{devdan_forward.1} parent=1 // pred_region
      %47 = dma.done [#allocation4], 128
    $region21: #{devdan_forward.1} parent=1 // pred_fallthru
      _
    // Predicated region
    $region22: #{devdan_forward.1} parent=1 // pred_check
      _
    $region23: #{devdan_forward.1} parent=1 // pred_check_branch
      %49 = sbr.rel (0) target = $region25
    $region24: #{devdan_forward.1} parent=1 // pred_region
      %51 = dma.done [#allocation7], 256
    $region25: #{devdan_forward.1} parent=1 // pred_fallthru
      _
    %v52 = vld [vmem:[#allocation3] sm:$0xff]
    %v53 = vld [vmem:[#allocation6] sm:$0xff]
    %v54 = vld [vmem:[#allocation6 + $0x8] sm:$0xff]
    %v55 = vld [vmem:[%s2] sm:$0x1]
    %v56 = vld [vmem:[%s3] sm:$0x1]
    %v58 = vperm.slane %v55, 0
    %vm60 = vcmask 261120
    %v62 = vsel %vm60, %v52, 0
    %v65 = vsel %vm60, %v53, 0
    %v68 = vsel %vm60, %v54, 0
    %70 = vmatpush.xpose.msra.mxu0 0.0
    %71 = vmatpush.xpose.msra.mxu0 0.0
    %72 = vmatpush.xpose.msra.mxu0 0.0
    %73 = vmatpush.xpose.msra.mxu0 0.0
    %74 = vmatpush.xpose.msra.mxu0 0.0
    %75 = vmatpush.xpose.msra.mxu0 0.0
    %76 = vmatpush.xpose.msra.mxu0 0.0
    %77 = vmatpush.xpose.msra.mxu0 0.0
    %78 = vmatpush.xpose.msra.mxu0 0.0
    %79 = vmatpush.xpose.msra.mxu0 0.0
    %80 = vmatpush.xpose.msra.mxu0 0.0
    %81 = vmatpush.xpose.msra.mxu0 0.0
    %82 = vmatpush.xpose.msra.mxu0 0.0
    %83 = vmatpush.xpose.msra.mxu0 0.0
    %84 = vmatpush.xpose.msra.mxu0 %v68
    %85 = vmatpush.xpose.msra.mxu0 %v65
    %86 = vmatmul.f32.gmra.mxu0 %v62
    %v87 = vpop.f32.mrf.mxu0
    %v88 = vadd.f32 %v58, %v87
    %89 = vdwg.mxu0
    %v90 = vmax.f32 %v88, 0.0
    %vm91 = vcmask 130048
    %92 = vst.msk [vmem:[#allocation8] sm:$0xff] %vm91, %v90
    %93 = vst.msk [vmem:[#allocation2] sm:$0xff] %vm91, 0.0
    %94 = vst.msk [vmem:[#allocation2 + $0x8] sm:$0xff] %vm91, 0.0
    %95 = vst.msk [vmem:[#allocation2] sm:$0xff] %vm91, %v90
    %v96 = vmul.f32 %v90, %v90
    %97 = vst.msk [vmem:[#allocation2 + $0x8] sm:$0xff] %vm91, %v96
    %v98 = vld [vmem:[#allocation2] sm:$0xff]
    %v99 = vld [vmem:[#allocation2 + $0x8] sm:$0xff]
    %v101 = vperm.slane %v56, 0
    %v104 = vsel %vm91, %v98, 0
    %v107 = vsel %vm91, %v99, 0
    %109 = vmatpush.msra.mxu0 0.0
    %110 = vmatpush.msra.mxu0 0.0
    %111 = vmatpush.msra.mxu0 0.0
    %112 = vmatpush.msra.mxu0 0.0
    %113 = vmatpush.msra.mxu0 0.0
    %114 = vmatpush.msra.mxu0 0.0
    %115 = vmatpush.msra.mxu0 0.0
    %116 = vmatpush.msra.mxu0 0.0
    %117 = vmatpush.msra.mxu0 0.0
    %118 = vmatpush.msra.mxu0 0.0
    %119 = vmatpush.msra.mxu0 0.0
    %120 = vmatpush.msra.mxu0 0.0
    %121 = vmatpush.msra.mxu0 0.0
    %122 = vmatpush.msra.mxu0 0.0
    %123 = vmatpush.msra.mxu0 %v54
    %124 = vmatpush.msra.mxu0 %v53
    %125 = vmatmul.f32.gmra.mxu0 %v104
    %v126 = vpop.f32.mrf.mxu0
    %v127 = vadd.f32 %v101, %v126
    %128 = vmatmul.f32.gmra.mxu0 %v107
    %v129 = vpop.f32.mrf.mxu0
    %v130 = vadd.f32 %v101, %v129
    %131 = vdwg.mxu0
    %v132 = vxor.u32 %v127, 2147483648
    %v133 = vxor.u32 %v130, 2147483648
    %v134 = vmul.f32 %v132, 1.442695
    %v135 = vpow.pop %v134
    %v136 = vmul.f32 %v133, 1.442695
    %v137 = vpow.pop %v136
    %v138 = vadd.f32 %v135, 1.0
    %v139 = vadd.f32 %v137, 1.0
    %v140 = vrcp.pop %v138
    %v141 = vmul.f32 %v138, %v140
    %v142 = vsub.f32 1.0, %v141
    %v143 = vmul.f32 %v140, %v142
    %v144 = vadd.f32 %v140, %v143
    %vm145 = vweird.f32 %v138
    %vm146 = vweird.f32 %v140
    %vm147 = vmor %vm145, %vm146
    %v148 = vsel %vm147, %v140, %v144
    %v149 = vand.u32 2147483647, %v138
    %vm150 = vcmp.eq.f32.partialorder %v149, 8.507059e+37
    %v151 = vand.u32 %v138, 2147483648
    %v152 = vor.u32 1.1754944e-38, %v151
    %v153 = vsel %vm150, %v152, %v148
    %v154 = vmul.f32 1.0, %v153
    %v155 = vrcp.pop %v139
    %v156 = vmul.f32 %v139, %v155
    %v157 = vsub.f32 1.0, %v156
    %v158 = vmul.f32 %v155, %v157
    %v159 = vadd.f32 %v155, %v158
    %vm160 = vweird.f32 %v139
    %vm161 = vweird.f32 %v155
    %vm162 = vmor %vm160, %vm161
    %v163 = vsel %vm162, %v155, %v159
    %v164 = vand.u32 2147483647, %v139
    %vm165 = vcmp.eq.f32.partialorder %v164, 8.507059e+37
    %v166 = vand.u32 %v139, 2147483648
    %v167 = vor.u32 1.1754944e-38, %v166
    %v168 = vsel %vm165, %v167, %v163
    %v169 = vmul.f32 1.0, %v168
    %170 = vst.msk [vmem:[#allocation9] sm:$0xff] %vm60, %v154
    %171 = vst.msk [vmem:[#allocation11] sm:$0xff] %vm60, %v169
    // Predicated region
    $region26: #{devdan_forward.1} parent=1 // pred_check
      _
    $region27: #{devdan_forward.1} parent=1 // pred_check_branch
      %173 = sbr.rel (0) target = $region29
    $region28: #{devdan_forward.1} parent=1 // pred_region
      %175 = vsyncadd [#allocation5], 0
      %s177 = sshll.u32 [#allocation8], 4
      %s178 = int_to_ptr.vmem [resolvable:$true] %s177
      %s179 = sshll.u32 %s4, 4
      %s180 = int_to_ptr.hbm [resolvable:$true] %s179
      %182 = dma.vmem_to_hbm [thread:$0]  %s178, 128, %s180, [#allocation5]
    $region29: #{devdan_forward.1} parent=1 // pred_fallthru
      _
    // Predicated region
    $region30: #{devdan_forward.1} parent=1 // pred_check
      _
    $region31: #{devdan_forward.1} parent=1 // pred_check_branch
      %184 = sbr.rel (0) target = $region33
    $region32: #{devdan_forward.1} parent=1 // pred_region
      %186 = vsyncadd [#allocation10], 0
      %s188 = sshll.u32 [#allocation9], 4
      %s189 = int_to_ptr.vmem [resolvable:$true] %s188
      %s190 = sshll.u32 %s5, 4
      %s191 = int_to_ptr.hbm [resolvable:$true] %s190
      %193 = dma.vmem_to_hbm [thread:$0]  %s189, 128, %s191, [#allocation10]
    $region33: #{devdan_forward.1} parent=1 // pred_fallthru
      _
    // Predicated region
    $region34: #{devdan_forward.1} parent=1 // pred_check
      _
    $region35: #{devdan_forward.1} parent=1 // pred_check_branch
      %195 = sbr.rel (0) target = $region37
    $region36: #{devdan_forward.1} parent=1 // pred_region
      %197 = vsyncadd [#allocation10], 0
      %s199 = sshll.u32 [#allocation11], 4
      %s200 = int_to_ptr.vmem [resolvable:$true] %s199
      %s201 = sshll.u32 %s6, 4
      %s202 = int_to_ptr.hbm [resolvable:$true] %s201
      %204 = dma.vmem_to_hbm [thread:$0]  %s200, 128, %s202, [#allocation10]
    $region37: #{devdan_forward.1} parent=1 // pred_fallthru
      _
    // Predicated region
    $region38: #{devdan_forward.1} parent=1 // pred_check
      _
    $region39: #{devdan_forward.1} parent=1 // pred_check_branch
      %206 = sbr.rel (0) target = $region41
    $region40: #{devdan_forward.1} parent=1 // pred_region
      %208 = dma.done [#allocation5], 128
    $region41: #{devdan_forward.1} parent=1 // pred_fallthru
      _
    // Predicated region
    $region42: #{devdan_forward.1} parent=1 // pred_check
      _
    $region43: #{devdan_forward.1} parent=1 // pred_check_branch
      %210 = sbr.rel (0) target = $region45
    $region44: #{devdan_forward.1} parent=1 // pred_region
      %212 = dma.done [#allocation10], 128
    $region45: #{devdan_forward.1} parent=1 // pred_fallthru
      _
    // Predicated region
    $region46: #{devdan_forward.1} parent=1 // pred_check
      _
    $region47: #{devdan_forward.1} parent=1 // pred_check_branch
      %214 = sbr.rel (0) target = $region49
    $region48: #{devdan_forward.1} parent=1 // pred_region
      %216 = dma.done [#allocation10], 128
    $region49: #{devdan_forward.1} parent=1 // pred_fallthru
      _
    %217 = vsyncpa [#allocation4], 1
    %218 = vsyncpa [#allocation7], 1
    %219 = vsyncpa [#allocation5], 1
    %220 = vsyncpa [#allocation10], 1

</llo_original>
